<compile_context>
chip_gen: v6e
topology: v6e:2x2x1
jax: 0.10.0
libtpu: 0.0.40
codegen_flags: <defaults>
</compile_context>

<pallas_src>
import jax
import jax.numpy as jnp
from jax.experimental import pallas as pl
from jax.experimental.pallas import tpu as pltpu


def attention_head_kernel(x_ref, w_ref, bw_ref, v_ref, ot_ref):
    # x_ref : (TB, S, F)  bf16  -- TB batch rows per grid step
    # w_ref : (F, H)      f32   -- W, stored transposed vs. nn.Linear
    # bw_ref: (1, H)      f32
    # v_ref : (1, H)      f32   -- V, stored as a row
    # ot_ref: (F, TB)     f32   -- context transposed (lane-dense output)
    tb, s, f = x_ref.shape

    xf = x_ref[...].astype(jnp.float32)                   # single upcast of the block
    x2 = xf.reshape(tb * s, f)                            # merge leading dims (S=8 tile-aligned)

    # att = tanh(x @ W + bW): one dense MXU matmul over all TB*S rows.
    att = jnp.tanh(
        jnp.dot(x2, w_ref[...], preferred_element_type=jnp.float32)
        + bw_ref[...]                                     # (1, H) broadcasts
    )                                                     # (TB*S, H) f32

    # score = att @ V as a VPU multiply + lane reduce (no N=1 MXU matmul).
    # bV omitted: softmax is shift-invariant.
    att3 = att.reshape(tb, s, att.shape[-1])              # split leading dim
    score = jnp.sum(att3 * v_ref[...], axis=-1)           # (TB, S), seq on lanes

    # Softmax over the sequence (lane) axis.
    m = jnp.max(score, axis=-1, keepdims=True)            # (TB, 1)
    e = jnp.exp(score - m)                                # (TB, S)
    denom = jnp.sum(e, axis=-1, keepdims=True)            # (TB, 1)
    attn = e * pl.reciprocal(denom, approx=True)          # (TB, S)

    # ctx[b] = sum_s attn[b, s] * x[b, s, :]: vectorized VPU multiply +
    # sublane reduce over S (replaces the old per-row matmul loop).
    ctx = jnp.sum(attn[:, :, None] * xf, axis=1)          # (TB, F) f32

    # Store transposed so the output block puts the batch tile on lanes.
    ot_ref[...] = ctx.T.astype(ot_ref.dtype)


def _choose_block_b(batch):
    """One full-batch step for small B; 512-row tiles (multiple of 128 ->
    lane-dense transposed output, and >= 2 grid steps so both v7x
    TensorCores are used) for large B."""
    b8 = ((batch + 7) // 8) * 8
    return b8 if b8 <= 512 else 512


def attention_head(x, w, bw, v, bv=None, *, block_b=None):
    """x: (B, S, F); w: (F, H); bw: (H,); v: (H,); bv ignored (softmax
    shift-invariance) -> (B, F)."""
    B, S, F = x.shape
    H = w.shape[1]
    out_dtype = x.dtype

    tb = _choose_block_b(B) if block_b is None else block_b
    assert tb % 8 == 0, tb
    b_pad = ((B + tb - 1) // tb) * tb
    n_steps = b_pad // tb
    # Transposed output block is (F, tb): for multi-step grids its lane
    # width must be a multiple of 128 to satisfy the (8, 128) block rule.
    assert n_steps == 1 or tb % 128 == 0, (tb, b_pad)

    if b_pad != B:
        # Zero-padded rows give a finite (uniform-softmax, zero-context)
        # result that is sliced away below.
        x = jnp.pad(x, ((0, b_pad - B), (0, 0), (0, 0)))

    x_bf = x.astype(jnp.bfloat16)                     # halve HBM traffic on x
    w2 = w.astype(jnp.float32)
    bw2 = bw.reshape(1, H).astype(jnp.float32)
    v2 = v.reshape(1, H).astype(jnp.float32)

    out_t = pl.pallas_call(
        attention_head_kernel,
        out_shape=jax.ShapeDtypeStruct((F, b_pad), jnp.float32),
        grid_spec=pltpu.PrefetchScalarGridSpec(
            num_scalar_prefetch=0,
            grid=(n_steps,),
            in_specs=[
                pl.BlockSpec((tb, S, F), lambda b: (b, 0, 0)),   # x tile
                pl.BlockSpec((F, H), lambda b: (0, 0)),          # W (resident)
                pl.BlockSpec((1, H), lambda b: (0, 0)),          # bW
                pl.BlockSpec((1, H), lambda b: (0, 0)),          # V row
            ],
            out_specs=pl.BlockSpec((F, tb), lambda b: (0, b)),   # ctx^T tile
        ),
        compiler_params=pltpu.CompilerParams(
            dimension_semantics=("parallel",),
        ),
    )(x_bf, w2, bw2, v2)

    return out_t.T[:B].astype(out_dtype)


def attention_head_ref(x, w, bw, v, bv):
    """Pure-JAX reference mirroring the PyTorch forward."""
    att = jnp.tanh(x @ w + bw)                 # (B, S, H)
    score = att @ v.reshape(-1, 1) + bv        # (B, S, 1)
    attn = jax.nn.softmax(score, axis=1)       # softmax over seq
    return jnp.sum(attn * x, axis=1)           # (B, F)


if __name__ == "__main__":
    key = jax.random.PRNGKey(0)
    kx, kw, kbw, kv, kbv = jax.random.split(key, 5)

    S, F, H = 8, 32, 16   # seq, in_features, hidden_dimension
    # nn.Linear(in_features, hidden): weight (H, F), bias (H,) -> stored transposed.
    w = jax.random.normal(kw, (F, H), dtype=jnp.float32) * 0.1
    bw = jax.random.normal(kbw, (H,), dtype=jnp.float32) * 0.1
    # nn.Linear(hidden, 1): weight (1, H), bias (1,)
    v = jax.random.normal(kv, (H,), dtype=jnp.float32) * 0.1
    bv = jax.random.normal(kbv, (), dtype=jnp.float32) * 0.1

    # (batch, forced block_b): padded single step, auto single step, and a
    # two-step grid with a lane-dense (128-wide) transposed output block.
    for B, blk in ((2, None), (64, None), (256, 128)):
        x = jax.random.normal(jax.random.fold_in(kx, B), (B, S, F), dtype=jnp.float32)
        out = jax.block_until_ready(attention_head(x, w, bw, v, bv, block_b=blk))
        ref = attention_head_ref(x, w, bw, v, bv)
        assert out.shape == (B, F), out.shape
        err = float(jnp.max(jnp.abs(out - ref)))
        assert jnp.allclose(out, ref, atol=1e-2, rtol=1e-2), (
            f"B={B} max abs err {err}"
        )
    print("KERNEL_OK")
</pallas_src>

<mosaic_0001>
module attributes {stable_mosaic.version = 11 : i64} {
  func.func @attention_head_kernel(%arg0: i32, %arg1: memref<8x8x32xbf16, #tpu.memory_space<vmem>>, %arg2: memref<32x16xf32, #tpu.memory_space<vmem>>, %arg3: memref<1x16xf32, #tpu.memory_space<vmem>>, %arg4: memref<1x16xf32, #tpu.memory_space<vmem>>, %arg5: memref<32x8xf32, #tpu.memory_space<vmem>>) attributes {dimension_semantics = [#tpu.dimension_semantics<parallel>], iteration_bounds = array<i64: 1>, scalar_prefetch = 0 : i64, scratch_operands = 0 : i64, tpu.core_type = #tpu.core_type<tc>, window_params = [{transform_indices = @transform_0, window_bounds = array<i64: 8, 8, 32>}, {pipeline_mode = #tpu.pipeline_mode<synchronous>, transform_indices = @transform_1, window_bounds = array<i64: 32, 16>}, {pipeline_mode = #tpu.pipeline_mode<synchronous>, transform_indices = @transform_2, window_bounds = array<i64: 1, 16>}, {pipeline_mode = #tpu.pipeline_mode<synchronous>, transform_indices = @transform_3, window_bounds = array<i64: 1, 16>}, {transform_indices = @transform_4, window_bounds = array<i64: 32, 8>}]} {
    %c0 = arith.constant 0 : index
    %c0_0 = arith.constant 0 : index
    %c0_1 = arith.constant 0 : index
    %0 = vector.load %arg1[%c0, %c0_0, %c0_1] : memref<8x8x32xbf16, #tpu.memory_space<vmem>>, vector<8x8x32xbf16>
    %1 = arith.extf %0 : vector<8x8x32xbf16> to vector<8x8x32xf32>
    %2 = vector.shape_cast %1 : vector<8x8x32xf32> to vector<64x32xf32>
    %c0_2 = arith.constant 0 : index
    %c0_3 = arith.constant 0 : index
    %3 = vector.load %arg2[%c0_2, %c0_3] : memref<32x16xf32, #tpu.memory_space<vmem>>, vector<32x16xf32>
    %cst = arith.constant dense<0.000000e+00> : vector<64x16xf32>
    %4 = tpu.matmul %2, %3, %cst {dimension_numbers = #tpu.dot_dimension_numbers<[1], [0], [0], [1], [0, 0, 1, 1], [], []>} : vector<64x32xf32>, vector<32x16xf32>, vector<64x16xf32> -> vector<64x16xf32>
    %c0_4 = arith.constant 0 : index
    %c0_5 = arith.constant 0 : index
    %5 = vector.load %arg3[%c0_4, %c0_5] : memref<1x16xf32, #tpu.memory_space<vmem>>, vector<1x16xf32>
    %6 = vector.broadcast %5 : vector<1x16xf32> to vector<64x16xf32>
    %7 = arith.addf %4, %6 : vector<64x16xf32>
    %8 = math.tanh %7 : vector<64x16xf32>
    %9 = vector.shape_cast %8 : vector<64x16xf32> to vector<8x8x16xf32>
    %c0_6 = arith.constant 0 : index
    %c0_7 = arith.constant 0 : index
    %10 = vector.load %arg4[%c0_6, %c0_7] : memref<1x16xf32, #tpu.memory_space<vmem>>, vector<1x16xf32>
    %11 = vector.shape_cast %10 : vector<1x16xf32> to vector<1x1x16xf32>
    %12 = vector.broadcast %11 : vector<1x1x16xf32> to vector<8x8x16xf32>
    %13 = arith.mulf %9, %12 : vector<8x8x16xf32>
    %cst_8 = arith.constant dense<0.000000e+00> : vector<8x8xf32>
    %14 = vector.multi_reduction <add>, %13, %cst_8 [2] : vector<8x8x16xf32> to vector<8x8xf32>
    %cst_9 = arith.constant dense<0xFF800000> : vector<8xf32>
    %15 = vector.multi_reduction <maximumf>, %14, %cst_9 [1] : vector<8x8xf32> to vector<8xf32>
    %16 = vector.shape_cast %15 : vector<8xf32> to vector<8x1xf32>
    %17 = vector.broadcast %16 : vector<8x1xf32> to vector<8x8xf32>
    %18 = arith.subf %14, %17 : vector<8x8xf32>
    %19 = math.exp %18 : vector<8x8xf32>
    %cst_10 = arith.constant dense<0.000000e+00> : vector<8xf32>
    %20 = vector.multi_reduction <add>, %19, %cst_10 [1] : vector<8x8xf32> to vector<8xf32>
    %21 = vector.shape_cast %20 : vector<8xf32> to vector<8x1xf32>
    %22 = tpu.reciprocal %21 {approx = true} : vector<8x1xf32> -> vector<8x1xf32>
    %23 = vector.broadcast %22 : vector<8x1xf32> to vector<8x8xf32>
    %24 = arith.mulf %19, %23 : vector<8x8xf32>
    %25 = vector.shape_cast %24 : vector<8x8xf32> to vector<8x8x1xf32>
    %26 = vector.broadcast %25 : vector<8x8x1xf32> to vector<8x8x32xf32>
    %27 = arith.mulf %26, %1 : vector<8x8x32xf32>
    %cst_11 = arith.constant dense<0.000000e+00> : vector<8x32xf32>
    %28 = vector.multi_reduction <add>, %27, %cst_11 [1] : vector<8x8x32xf32> to vector<8x32xf32>
    %29 = tpu.transpose %28, [1, 0] : vector<8x32xf32> -> vector<32x8xf32>
    %c0_12 = arith.constant 0 : index
    %c0_13 = arith.constant 0 : index
    %30 = vector.load %arg5[%c0_12, %c0_13] : memref<32x8xf32, #tpu.memory_space<vmem>>, vector<32x8xf32>
    tpu.vector_store %arg5[%c0_12, %c0_13], %29 {strides = array<i32>} : memref<32x8xf32, #tpu.memory_space<vmem>>, vector<32x8xf32>,
    return
  }
  func.func @transform_0(%arg0: i32) -> (i32, i32, i32) {
    %c0_i32 = arith.constant 0 : i32
    %c0_i32_0 = arith.constant 0 : i32
    %c0_i32_1 = arith.constant 0 : i32
    return %arg0, %c0_i32, %c0_i32_0 : i32, i32, i32
  }
  func.func @transform_1(%arg0: i32) -> (i32, i32) {
    %c0_i32 = arith.constant 0 : i32
    %c0_i32_0 = arith.constant 0 : i32
    %c0_i32_1 = arith.constant 0 : i32
    return %c0_i32, %c0_i32_0 : i32, i32
  }
  func.func @transform_2(%arg0: i32) -> (i32, i32) {
    %c0_i32 = arith.constant 0 : i32
    %c0_i32_0 = arith.constant 0 : i32
    %c0_i32_1 = arith.constant 0 : i32
    return %c0_i32, %c0_i32_0 : i32, i32
  }
  func.func @transform_3(%arg0: i32) -> (i32, i32) {
    %c0_i32 = arith.constant 0 : i32
    %c0_i32_0 = arith.constant 0 : i32
    %c0_i32_1 = arith.constant 0 : i32
    return %c0_i32, %c0_i32_0 : i32, i32
  }
  func.func @transform_4(%arg0: i32) -> (i32, i32) {
    %c0_i32 = arith.constant 0 : i32
    %c0_i32_0 = arith.constant 0 : i32
    return %c0_i32, %arg0 : i32, i32
  }
}

</mosaic_0001>

<llo_original>
// kernel: tpu_custom_call.1
$region0: #{tpu_custom_call.1}
  #allocation0 [shape = 'u32[]', space=smem, size = 0x4, offset = 0x4, fixed_abs, tag = 'smem constant byte address 0x4 - core index']
  #allocation1 [shape = 'u32[144,128]{1,0:T(1,128)}', space=vmem, size = 0x12000, scoped, tag = 'internal scratch']
  %s0 = inlined_call_operand.vmem [shape: bf16[8,8,32], index: 0, kind: input, shape index: {}]
  %s1 = inlined_call_operand.vmem [shape: f32[32,16], index: 1, kind: input, shape index: {}]
  %s2 = inlined_call_operand.vmem [shape: f32[1,16], index: 2, kind: input, shape index: {}]
  %s3 = inlined_call_operand.vmem [shape: f32[1,16], index: 3, kind: input, shape index: {}]
  %s4 = inlined_call_operand.vmem [shape: f32[32,8], index: 4, kind: output, shape index: {}]
  %s5 = sld [smem:[#allocation0]]
  $region26: #{tpu_custom_call.1} parent=0
    _
  %s7 = ssub.s32 1, %s5
  %s8 = scalar_select 0, %s7, %s5
  // Predicated region
  $region2: #{tpu_custom_call.1} parent=0 // pred_check
    _
  $region3: #{tpu_custom_call.1} parent=0 // pred_check_branch
    %10 = sbr.rel (0) target = $region5
  $region4: #{tpu_custom_call.1} parent=0 // pred_region
    _
  $region5: #{tpu_custom_call.1} parent=0 // pred_fallthru
    _
  // Predicated region
  $region6: #{tpu_custom_call.1} parent=0 // pred_check
    _
  $region7: #{tpu_custom_call.1} parent=0 // pred_check_branch
    %12 = sbr.rel (0) target = $region9
  $region8: #{tpu_custom_call.1} parent=0 // pred_region
    _
  $region9: #{tpu_custom_call.1} parent=0 // pred_fallthru
    _
  // Predicated region
  $region10: #{tpu_custom_call.1} parent=0 // pred_check
    _
  $region11: #{tpu_custom_call.1} parent=0 // pred_check_branch
    %14 = sbr.rel (0) target = $region13
  $region12: #{tpu_custom_call.1} parent=0 // pred_region
    _
  $region13: #{tpu_custom_call.1} parent=0 // pred_fallthru
    _
  // Predicated region
  $region14: #{tpu_custom_call.1} parent=0 // pred_check
    _
  $region15: #{tpu_custom_call.1} parent=0 // pred_check_branch
    %16 = sbr.rel (0) target = $region17
  $region16: #{tpu_custom_call.1} parent=0 // pred_region
    _
  $region17: #{tpu_custom_call.1} parent=0 // pred_fallthru
    _
  %v17 = vld [vmem:[%s0] sm:$0xf]
  %v18 = vld [vmem:[%s0 + $0x4] sm:$0xf]
  %v19 = vld [vmem:[%s0 + $0x8] sm:$0xf]
  %v20 = vld [vmem:[%s0 + $0xc] sm:$0xf]
  %v21 = vld [vmem:[%s0 + $0x10] sm:$0xf]
  %v22 = vld [vmem:[%s0 + $0x14] sm:$0xf]
  %v23 = vld [vmem:[%s0 + $0x18] sm:$0xf]
  %v24 = vld [vmem:[%s0 + $0x1c] sm:$0xf]
  %v25 = vunpack.c.l.bf16 %v17
  %v26 = vunpack.c.l.bf16 %v18
  %v27 = vunpack.c.l.bf16 %v19
  %v28 = vunpack.c.l.bf16 %v20
  %v29 = vunpack.c.l.bf16 %v21
  %v30 = vunpack.c.l.bf16 %v22
  %v31 = vunpack.c.l.bf16 %v23
  %v32 = vunpack.c.l.bf16 %v24
  %v33 = vld [vmem:[%s1] sm:$0xff]
  %v34 = vld [vmem:[%s1 + $0x8] sm:$0xff]
  %v35 = vld [vmem:[%s1 + $0x10] sm:$0xff]
  %v36 = vld [vmem:[%s1 + $0x18] sm:$0xff]
  %v37 = vld [vmem:[%s2] sm:$0x1]
  %v39 = vlaneseq
  %v40 = vshrl.u32 %v39, 7
  %v41 = vsub.s32 0, %v40
  %v42 = vrot.slane %v37, %v41
  %vm44 = vcmask 261120
  %v46 = vsel %vm44, %v25, 0
  %v49 = vsel %vm44, %v26, 0
  %v52 = vsel %vm44, %v27, 0
  %v55 = vsel %vm44, %v28, 0
  %v58 = vsel %vm44, %v29, 0
  %v61 = vsel %vm44, %v30, 0
  %v64 = vsel %vm44, %v31, 0
  %v67 = vsel %vm44, %v32, 0
  %69 = vmatprep.subr.mxu0 0.0
  %70 = vmatpush1.msra.mxu0 0.0
  %71 = vmatprep.subr.mxu0 0.0
  %72 = vmatpush1.msra.mxu0 0.0
  %73 = vmatprep.subr.mxu0 0.0
  %74 = vmatpush1.msra.mxu0 0.0
  %75 = vmatprep.subr.mxu0 0.0
  %76 = vmatpush1.msra.mxu0 0.0
  %77 = vmatprep.subr.mxu0 0.0
  %78 = vmatpush1.msra.mxu0 0.0
  %79 = vmatprep.subr.mxu0 0.0
  %80 = vmatpush1.msra.mxu0 0.0
  %81 = vmatprep.subr.mxu0 0.0
  %82 = vmatpush1.msra.mxu0 0.0
  %83 = vmatprep.subr.mxu0 0.0
  %84 = vmatpush1.msra.mxu0 0.0
  %85 = vmatprep.subr.mxu0 0.0
  %86 = vmatpush1.msra.mxu0 0.0
  %87 = vmatprep.subr.mxu0 0.0
  %88 = vmatpush1.msra.mxu0 0.0
  %89 = vmatprep.subr.mxu0 0.0
  %90 = vmatpush1.msra.mxu0 0.0
  %91 = vmatprep.subr.mxu0 0.0
  %92 = vmatpush1.msra.mxu0 0.0
  %93 = vmatprep.subr.mxu0 0.0
  %94 = vmatpush1.msra.mxu0 %v36
  %95 = vmatprep.subr.mxu0 0.0
  %96 = vmatpush1.msra.mxu0 %v35
  %97 = vmatprep.subr.mxu0 0.0
  %98 = vmatpush1.msra.mxu0 %v34
  %99 = vmatprep.subr.mxu0 0.0
  %100 = vmatpush1.msra.mxu0 %v33
  %101 = vmatprep.subr.mxu0 0.0
  %102 = vmatpush2.msra.mxu0 0.0
  %103 = vmatprep.subr.mxu0 0.0
  %104 = vmatpush2.msra.mxu0 0.0
  %105 = vmatprep.subr.mxu0 0.0
  %106 = vmatpush2.msra.mxu0 0.0
  %107 = vmatprep.subr.mxu0 0.0
  %108 = vmatpush2.msra.mxu0 0.0
  %109 = vmatprep.subr.mxu0 0.0
  %110 = vmatpush2.msra.mxu0 0.0
  %111 = vmatprep.subr.mxu0 0.0
  %112 = vmatpush2.msra.mxu0 0.0
  %113 = vmatprep.subr.mxu0 0.0
  %114 = vmatpush2.msra.mxu0 0.0
  %115 = vmatprep.subr.mxu0 0.0
  %116 = vmatpush2.msra.mxu0 0.0
  %117 = vmatprep.subr.mxu0 0.0
  %118 = vmatpush2.msra.mxu0 0.0
  %119 = vmatprep.subr.mxu0 0.0
  %120 = vmatpush2.msra.mxu0 0.0
  %121 = vmatprep.subr.mxu0 0.0
  %122 = vmatpush2.msra.mxu0 0.0
  %123 = vmatprep.subr.mxu0 0.0
  %124 = vmatpush2.msra.mxu0 0.0
  %125 = vmatprep.subr.mxu0 0.0
  %126 = vmatpush2.msra.mxu0 0.0
  %127 = vmatprep.subr.mxu0 0.0
  %128 = vmatpush2.msra.mxu0 0.0
  %129 = vmatprep.subr.mxu0 0.0
  %130 = vmatpush2.msra.mxu0 0.0
  %131 = vmatprep.subr.mxu0 0.0
  %132 = vmatpush2.msra.mxu0 0.0
  %133 = vmatprep.mubr.f32.mxu0 0.0
  %134 = vmatmul.mubr.f32.gmra.mxu0 %v46
  %v135 = vpop.f32.mrf.mxu0
  %v136 = vadd.f32 %v42, %v135
  %v137 = vpop.f32.mrf.mxu0
  %138 = vmatprep.mubr.f32.mxu0 0.0
  %139 = vmatmul.mubr.f32.gmra.mxu0 %v49
  %v140 = vpop.f32.mrf.mxu0
  %v141 = vadd.f32 %v42, %v140
  %v142 = vpop.f32.mrf.mxu0
  %143 = vmatprep.mubr.f32.mxu0 0.0
  %144 = vmatmul.mubr.f32.gmra.mxu0 %v52
  %v145 = vpop.f32.mrf.mxu0
  %v146 = vadd.f32 %v42, %v145
  %v147 = vpop.f32.mrf.mxu0
  %148 = vmatprep.mubr.f32.mxu0 0.0
  %149 = vmatmul.mubr.f32.gmra.mxu0 %v55
  %v150 = vpop.f32.mrf.mxu0
  %v151 = vadd.f32 %v42, %v150
  %v152 = vpop.f32.mrf.mxu0
  %153 = vmatprep.mubr.f32.mxu0 0.0
  %154 = vmatmul.mubr.f32.gmra.mxu0 %v58
  %v155 = vpop.f32.mrf.mxu0
  %v156 = vadd.f32 %v42, %v155
  %v157 = vpop.f32.mrf.mxu0
  %158 = vmatprep.mubr.f32.mxu0 0.0
  %159 = vmatmul.mubr.f32.gmra.mxu0 %v61
  %v160 = vpop.f32.mrf.mxu0
  %v161 = vadd.f32 %v42, %v160
  %v162 = vpop.f32.mrf.mxu0
  %163 = vmatprep.mubr.f32.mxu0 0.0
  %164 = vmatmul.mubr.f32.gmra.mxu0 %v64
  %v165 = vpop.f32.mrf.mxu0
  %v166 = vadd.f32 %v42, %v165
  %v167 = vpop.f32.mrf.mxu0
  %168 = vmatprep.mubr.f32.mxu0 0.0
  %169 = vmatmul.mubr.f32.gmra.mxu0 %v67
  %v170 = vpop.f32.mrf.mxu0
  %v171 = vadd.f32 %v42, %v170
  %v172 = vpop.f32.mrf.mxu0
  %173 = vdwg.mxu0
  %v174 = vtanh.pop %v136
  %v175 = vtanh.pop %v141
  %v176 = vtanh.pop %v146
  %v177 = vtanh.pop %v151
  %v178 = vtanh.pop %v156
  %v179 = vtanh.pop %v161
  %v180 = vtanh.pop %v166
  %v181 = vtanh.pop %v171
  %v182 = vld [vmem:[%s3] sm:$0x1]
  %v184 = vlaneseq
  %v185 = vshrl.u32 %v184, 7
  %v186 = vsub.s32 0, %v185
  %v187 = vrot.slane %v182, %v186
  %v189 = vmul.f32 %v174, %v187
  %v190 = vmul.f32 %v175, %v187
  %v191 = vmul.f32 %v176, %v187
  %v192 = vmul.f32 %v177, %v187
  %v193 = vmul.f32 %v178, %v187
  %v194 = vmul.f32 %v179, %v187
  %v195 = vmul.f32 %v180, %v187
  %v196 = vmul.f32 %v181, %v187
  %vm197 = vcmask 130048
  %v198 = vsel %vm197, %v189, 0.0
  %199 = vadd.xlane.f32.xlu0 %v198
  %v200 = vpop.xlane.xlu0 %199
  %v201 = vsel %vm197, %v190, 0.0
  %202 = vadd.xlane.f32.xlu0 %v201
  %v203 = vpop.xlane.xlu0 %202
  %v204 = vsel %vm197, %v191, 0.0
  %205 = vadd.xlane.f32.xlu0 %v204
  %v206 = vpop.xlane.xlu0 %205
  %v207 = vsel %vm197, %v192, 0.0
  %208 = vadd.xlane.f32.xlu0 %v207
  %v209 = vpop.xlane.xlu0 %208
  %v210 = vsel %vm197, %v193, 0.0
  %211 = vadd.xlane.f32.xlu0 %v210
  %v212 = vpop.xlane.xlu0 %211
  %v213 = vsel %vm197, %v194, 0.0
  %214 = vadd.xlane.f32.xlu0 %v213
  %v215 = vpop.xlane.xlu0 %214
  %v216 = vsel %vm197, %v195, 0.0
  %217 = vadd.xlane.f32.xlu0 %v216
  %v218 = vpop.xlane.xlu0 %217
  %v219 = vsel %vm197, %v196, 0.0
  %220 = vadd.xlane.f32.xlu0 %v219
  %v221 = vpop.xlane.xlu0 %220
  %v230 = vlaneseq
  %v231 = vand.u32 %v230, 127
  %v232 = vlaneseq
  %v233 = vshrl.u32 %v232, 7
  %v234 = vsub.s32 %v231, %v233
  %v235 = vrot.slane %v200, %v234
  %v236 = vlaneseq
  %v237 = vshrl.u32 %v236, 7
  %v238 = vsub.s32 %v231, %v237
  %v239 = vrot.slane %v203, %v238
  %v240 = vlaneseq
  %v241 = vshrl.u32 %v240, 7
  %v242 = vsub.s32 %v231, %v241
  %v243 = vrot.slane %v206, %v242
  %v244 = vlaneseq
  %v245 = vshrl.u32 %v244, 7
  %v246 = vsub.s32 %v231, %v245
  %v247 = vrot.slane %v209, %v246
  %v248 = vlaneseq
  %v249 = vshrl.u32 %v248, 7
  %v250 = vsub.s32 %v231, %v249
  %v251 = vrot.slane %v212, %v250
  %v252 = vlaneseq
  %v253 = vshrl.u32 %v252, 7
  %v254 = vsub.s32 %v231, %v253
  %v255 = vrot.slane %v215, %v254
  %v256 = vlaneseq
  %v257 = vshrl.u32 %v256, 7
  %v258 = vsub.s32 %v231, %v257
  %v259 = vrot.slane %v218, %v258
  %v260 = vlaneseq
  %v261 = vshrl.u32 %v260, 7
  %v262 = vsub.s32 %v231, %v261
  %v263 = vrot.slane %v221, %v262
  %vm264 = vcmask 1041409
  %v265 = vsel %vm264, %v239, %v235
  %vm266 = vcmask 1042434
  %v267 = vsel %vm266, %v243, %v265
  %vm268 = vcmask 1043459
  %v269 = vsel %vm268, %v247, %v267
  %vm270 = vcmask 1044484
  %v271 = vsel %vm270, %v251, %v269
  %vm272 = vcmask 1045509
  %v273 = vsel %vm272, %v255, %v271
  %vm274 = vcmask 1046534
  %v275 = vsel %vm274, %v259, %v273
  %vm276 = vcmask 1047559
  %v277 = vsel %vm276, %v263, %v275
  %vm279 = vcmask 64512
  %v280 = vsel %vm279, %v277, -inf
  %281 = vmax.xlane.f32.xlu0 %v280
  %v282 = vpop.xlane.xlu0 %281
  %v284 = vlaneseq
  %v285 = vshrl.u32 %v284, 7
  %v286 = vsub.s32 0, %v285
  %v287 = vrot.slane %v282, %v286
  %v288 = vlaneseq
  %v289 = vshrl.u32 %v288, 7
  %v290 = vsub.s32 1, %v289
  %v291 = vrot.slane %v282, %v290
  %v292 = vlaneseq
  %v293 = vshrl.u32 %v292, 7
  %v294 = vsub.s32 2, %v293
  %v295 = vrot.slane %v282, %v294
  %v296 = vlaneseq
  %v297 = vshrl.u32 %v296, 7
  %v298 = vsub.s32 3, %v297
  %v299 = vrot.slane %v282, %v298
  %v300 = vlaneseq
  %v301 = vshrl.u32 %v300, 7
  %v302 = vsub.s32 4, %v301
  %v303 = vrot.slane %v282, %v302
  %v304 = vlaneseq
  %v305 = vshrl.u32 %v304, 7
  %v306 = vsub.s32 5, %v305
  %v307 = vrot.slane %v282, %v306
  %v308 = vlaneseq
  %v309 = vshrl.u32 %v308, 7
  %v310 = vsub.s32 6, %v309
  %v311 = vrot.slane %v282, %v310
  %v312 = vlaneseq
  %v313 = vshrl.u32 %v312, 7
  %v314 = vsub.s32 7, %v313
  %v315 = vrot.slane %v282, %v314
  %v324 = vsub.f32 %v200, %v287
  %v325 = vsub.f32 %v203, %v291
  %v326 = vsub.f32 %v206, %v295
  %v327 = vsub.f32 %v209, %v299
  %v328 = vsub.f32 %v212, %v303
  %v329 = vsub.f32 %v215, %v307
  %v330 = vsub.f32 %v218, %v311
  %v331 = vsub.f32 %v221, %v315
  %v332 = vmul.f32 %v324, 1.442695
  %v333 = vpow.pop %v332
  %v334 = vmul.f32 %v325, 1.442695
  %v335 = vpow.pop %v334
  %v336 = vmul.f32 %v326, 1.442695
  %v337 = vpow.pop %v336
  %v338 = vmul.f32 %v327, 1.442695
  %v339 = vpow.pop %v338
  %v340 = vmul.f32 %v328, 1.442695
  %v341 = vpow.pop %v340
  %v342 = vmul.f32 %v329, 1.442695
  %v343 = vpow.pop %v342
  %v344 = vmul.f32 %v330, 1.442695
  %v345 = vpow.pop %v344
  %v346 = vmul.f32 %v331, 1.442695
  %v347 = vpow.pop %v346
  %356 = vset.pattern.permute.xlu0 0
  %357 = vperm.xlu0 %356, %v333
  %v358 = vpop.permute.xlu0 %357
  %359 = vset.pattern.permute.xlu0 0
  %360 = vperm.xlu0 %359, %v335
  %v361 = vpop.permute.xlu0 %360
  %362 = vset.pattern.permute.xlu0 0
  %363 = vperm.xlu0 %362, %v337
  %v364 = vpop.permute.xlu0 %363
  %365 = vset.pattern.permute.xlu0 0
  %366 = vperm.xlu0 %365, %v339
  %v367 = vpop.permute.xlu0 %366
  %368 = vset.pattern.permute.xlu0 0
  %369 = vperm.xlu0 %368, %v341
  %v370 = vpop.permute.xlu0 %369
  %371 = vset.pattern.permute.xlu0 0
  %372 = vperm.xlu0 %371, %v343
  %v373 = vpop.permute.xlu0 %372
  %374 = vset.pattern.permute.xlu0 0
  %375 = vperm.xlu0 %374, %v345
  %v376 = vpop.permute.xlu0 %375
  %377 = vset.pattern.permute.xlu0 0
  %378 = vperm.xlu0 %377, %v347
  %v379 = vpop.permute.xlu0 %378
  %v380 = vlaneseq
  %v381 = vshrl.u32 %v380, 7
  %v382 = vsub.s32 %v231, %v381
  %v383 = vrot.slane %v358, %v382
  %v384 = vlaneseq
  %v385 = vshrl.u32 %v384, 7
  %v386 = vsub.s32 %v231, %v385
  %v387 = vrot.slane %v361, %v386
  %v388 = vlaneseq
  %v389 = vshrl.u32 %v388, 7
  %v390 = vsub.s32 %v231, %v389
  %v391 = vrot.slane %v364, %v390
  %v392 = vlaneseq
  %v393 = vshrl.u32 %v392, 7
  %v394 = vsub.s32 %v231, %v393
  %v395 = vrot.slane %v367, %v394
  %v396 = vlaneseq
  %v397 = vshrl.u32 %v396, 7
  %v398 = vsub.s32 %v231, %v397
  %v399 = vrot.slane %v370, %v398
  %v400 = vlaneseq
  %v401 = vshrl.u32 %v400, 7
  %v402 = vsub.s32 %v231, %v401
  %v403 = vrot.slane %v373, %v402
  %v404 = vlaneseq
  %v405 = vshrl.u32 %v404, 7
  %v406 = vsub.s32 %v231, %v405
  %v407 = vrot.slane %v376, %v406
  %v408 = vlaneseq
  %v409 = vshrl.u32 %v408, 7
  %v410 = vsub.s32 %v231, %v409
  %v411 = vrot.slane %v379, %v410
  %v412 = vsel %vm264, %v387, %v383
  %v413 = vsel %vm266, %v391, %v412
  %v414 = vsel %vm268, %v395, %v413
  %v415 = vsel %vm270, %v399, %v414
  %v416 = vsel %vm272, %v403, %v415
  %v417 = vsel %vm274, %v407, %v416
  %v418 = vsel %vm276, %v411, %v417
  %v420 = vsel %vm279, %v418, 0.0
  %421 = vadd.xlane.f32.xlu0 %v420
  %v422 = vpop.xlane.xlu0 %421
  %v423 = vrcp.pop %v422
  %v425 = vlaneseq
  %v426 = vshrl.u32 %v425, 7
  %v427 = vsub.s32 0, %v426
  %v428 = vrot.slane %v423, %v427
  %v429 = vlaneseq
  %v430 = vshrl.u32 %v429, 7
  %v431 = vsub.s32 1, %v430
  %v432 = vrot.slane %v423, %v431
  %v433 = vlaneseq
  %v434 = vshrl.u32 %v433, 7
  %v435 = vsub.s32 2, %v434
  %v436 = vrot.slane %v423, %v435
  %v437 = vlaneseq
  %v438 = vshrl.u32 %v437, 7
  %v439 = vsub.s32 3, %v438
  %v440 = vrot.slane %v423, %v439
  %v441 = vlaneseq
  %v442 = vshrl.u32 %v441, 7
  %v443 = vsub.s32 4, %v442
  %v444 = vrot.slane %v423, %v443
  %v445 = vlaneseq
  %v446 = vshrl.u32 %v445, 7
  %v447 = vsub.s32 5, %v446
  %v448 = vrot.slane %v423, %v447
  %v449 = vlaneseq
  %v450 = vshrl.u32 %v449, 7
  %v451 = vsub.s32 6, %v450
  %v452 = vrot.slane %v423, %v451
  %v453 = vlaneseq
  %v454 = vshrl.u32 %v453, 7
  %v455 = vsub.s32 7, %v454
  %v456 = vrot.slane %v423, %v455
  %v465 = vmul.f32 %v333, %v428
  %v466 = vmul.f32 %v335, %v432
  %v467 = vmul.f32 %v337, %v436
  %v468 = vmul.f32 %v339, %v440
  %v469 = vmul.f32 %v341, %v444
  %v470 = vmul.f32 %v343, %v448
  %v471 = vmul.f32 %v345, %v452
  %v472 = vmul.f32 %v347, %v456
  %474 = vset.pattern.permute.xlu0 0
  %475 = vperm.xlu0 %474, %v465
  %v476 = vpop.permute.xlu0 %475
  %479 = vset.pattern.permute.xlu0 0
  %480 = vperm.xlu0 %479, %v466
  %v481 = vpop.permute.xlu0 %480
  %484 = vset.pattern.permute.xlu0 0
  %485 = vperm.xlu0 %484, %v467
  %v486 = vpop.permute.xlu0 %485
  %489 = vset.pattern.permute.xlu0 0
  %490 = vperm.xlu0 %489, %v468
  %v491 = vpop.permute.xlu0 %490
  %494 = vset.pattern.permute.xlu0 0
  %495 = vperm.xlu0 %494, %v469
  %v496 = vpop.permute.xlu0 %495
  %499 = vset.pattern.permute.xlu0 0
  %500 = vperm.xlu0 %499, %v470
  %v501 = vpop.permute.xlu0 %500
  %504 = vset.pattern.permute.xlu0 0
  %505 = vperm.xlu0 %504, %v471
  %v506 = vpop.permute.xlu0 %505
  %509 = vset.pattern.permute.xlu0 0
  %510 = vperm.xlu0 %509, %v472
  %v511 = vpop.permute.xlu0 %510
  %v513 = vmul.f32 %v476, %v25
  %v514 = vmul.f32 %v481, %v26
  %v515 = vmul.f32 %v486, %v27
  %v516 = vmul.f32 %v491, %v28
  %v517 = vmul.f32 %v496, %v29
  %v518 = vmul.f32 %v501, %v30
  %v519 = vmul.f32 %v506, %v31
  %v520 = vmul.f32 %v511, %v32
  %v521 = vsel %vm44, %v513, 0.0
  %v522 = vrot.slane %v521, 4
  %v523 = vadd.f32 %v521, %v522
  %v524 = vrot.slane %v523, 2
  %v525 = vadd.f32 %v523, %v524
  %v526 = vrot.slane %v525, 1
  %v527 = vadd.f32 %v525, %v526
  %v528 = vsel %vm44, %v514, 0.0
  %v529 = vrot.slane %v528, 4
  %v530 = vadd.f32 %v528, %v529
  %v531 = vrot.slane %v530, 2
  %v532 = vadd.f32 %v530, %v531
  %v533 = vrot.slane %v532, 1
  %v534 = vadd.f32 %v532, %v533
  %v535 = vsel %vm44, %v515, 0.0
  %v536 = vrot.slane %v535, 4
  %v537 = vadd.f32 %v535, %v536
  %v538 = vrot.slane %v537, 2
  %v539 = vadd.f32 %v537, %v538
  %v540 = vrot.slane %v539, 1
  %v541 = vadd.f32 %v539, %v540
  %v542 = vsel %vm44, %v516, 0.0
  %v543 = vrot.slane %v542, 4
  %v544 = vadd.f32 %v542, %v543
  %v545 = vrot.slane %v544, 2
  %v546 = vadd.f32 %v544, %v545
  %v547 = vrot.slane %v546, 1
  %v548 = vadd.f32 %v546, %v547
  %v549 = vsel %vm44, %v517, 0.0
  %v550 = vrot.slane %v549, 4
  %v551 = vadd.f32 %v549, %v550
  %v552 = vrot.slane %v551, 2
  %v553 = vadd.f32 %v551, %v552
  %v554 = vrot.slane %v553, 1
  %v555 = vadd.f32 %v553, %v554
  %v556 = vsel %vm44, %v518, 0.0
  %v557 = vrot.slane %v556, 4
  %v558 = vadd.f32 %v556, %v557
  %v559 = vrot.slane %v558, 2
  %v560 = vadd.f32 %v558, %v559
  %v561 = vrot.slane %v560, 1
  %v562 = vadd.f32 %v560, %v561
  %v563 = vsel %vm44, %v519, 0.0
  %v564 = vrot.slane %v563, 4
  %v565 = vadd.f32 %v563, %v564
  %v566 = vrot.slane %v565, 2
  %v567 = vadd.f32 %v565, %v566
  %v568 = vrot.slane %v567, 1
  %v569 = vadd.f32 %v567, %v568
  %v570 = vsel %vm44, %v520, 0.0
  %v571 = vrot.slane %v570, 4
  %v572 = vadd.f32 %v570, %v571
  %v573 = vrot.slane %v572, 2
  %v574 = vadd.f32 %v572, %v573
  %v575 = vrot.slane %v574, 1
  %v576 = vadd.f32 %v574, %v575
  %v585 = vsel %vm264, %v534, %v527
  %v586 = vsel %vm266, %v541, %v585
  %v587 = vsel %vm268, %v548, %v586
  %v588 = vsel %vm270, %v555, %v587
  %v589 = vsel %vm272, %v562, %v588
  %v590 = vsel %vm274, %v569, %v589
  %v591 = vsel %vm276, %v576, %v590
  %593 = vxpose.xlu0.b32.start [1/16] %v591, 128
  %594 = vxpose.xlu0.b32.cont [2/16] 0.0, 128
  %595 = vxpose.xlu0.b32.cont [3/16] 0.0, 128
  %596 = vxpose.xlu0.b32.cont [4/16] 0.0, 128
  %597 = vxpose.xlu0.b32.cont [5/16] 0.0, 128
  %598 = vxpose.xlu0.b32.cont [6/16] 0.0, 128
  %599 = vxpose.xlu0.b32.cont [7/16] 0.0, 128
  %600 = vxpose.xlu0.b32.cont [8/16] 0.0, 128
  %601 = vxpose.xlu0.b32.cont [9/16] 0.0, 128
  %602 = vxpose.xlu0.b32.cont [10/16] 0.0, 128
  %603 = vxpose.xlu0.b32.cont [11/16] 0.0, 128
  %604 = vxpose.xlu0.b32.cont [12/16] 0.0, 128
  %605 = vxpose.xlu0.b32.cont [13/16] 0.0, 128
  %606 = vxpose.xlu0.b32.cont [14/16] 0.0, 128
  %607 = vxpose.xlu0.b32.cont [15/16] 0.0, 128
  %608 = vxpose.xlu0.b32.end [16/16] 0.0, 128
  %v609 = vpop.trf.xlu0
  %v610 = vpop.trf.xlu0
  %v611 = vpop.trf.xlu0
  %v612 = vpop.trf.xlu0
  %v613 = vpop.trf.xlu0
  %v614 = vpop.trf.xlu0
  %v615 = vpop.trf.xlu0
  %v616 = vpop.trf.xlu0
  %v617 = vpop.trf.xlu0
  %v618 = vpop.trf.xlu0
  %v619 = vpop.trf.xlu0
  %v620 = vpop.trf.xlu0
  %v621 = vpop.trf.xlu0
  %v622 = vpop.trf.xlu0
  %v623 = vpop.trf.xlu0
  %v624 = vpop.trf.xlu0
  %625 = vst.msk [vmem:[%s4] sm:$0xff] %vm279, %v609
  %626 = vst.msk [vmem:[%s4 + $0x8] sm:$0xff] %vm279, %v610
  %627 = vst.msk [vmem:[%s4 + $0x10] sm:$0xff] %vm279, %v611
  %628 = vst.msk [vmem:[%s4 + $0x18] sm:$0xff] %vm279, %v612
  // Predicated region
  $region18: #{tpu_custom_call.1} parent=0 // pred_check
    _
  $region19: #{tpu_custom_call.1} parent=0 // pred_check_branch
    %630 = sbr.rel (0) target = $region21
  $region20: #{tpu_custom_call.1} parent=0 // pred_region
    _
  $region21: #{tpu_custom_call.1} parent=0 // pred_fallthru
    _
  // Predicated region
  $region22: #{tpu_custom_call.1} parent=0 // pred_check
    _
  $region23: #{tpu_custom_call.1} parent=0 // pred_check_branch
    %632 = sbr.rel (0) target = $region25
  $region24: #{tpu_custom_call.1} parent=0 // pred_region
    _
  $region25: #{tpu_custom_call.1} parent=0 // pred_fallthru
    _

</llo_original>
